<compile_context>
chip_gen: v7x
topology: tpu7x:2x2x1
jax: 0.10.0
libtpu: 0.0.40
codegen_flags: <defaults>
</compile_context>

<pallas_src>
import jax
import jax.numpy as jnp
from jax.experimental import pallas as pl
from jax.experimental.pallas import tpu as pltpu


def _round_up(x, m):
    return ((x + m - 1) // m) * m


def _td_kernel_masked(x_ref, w_ref, b_ref, m_ref, o_ref):
    # x_ref: (TM, a) f32, w_ref: (a, TN) f32, b_ref: (1, TN) f32,
    # m_ref: (TM, 1) f32, o_ref: (TM, TN) f32
    y = jnp.dot(x_ref[...].astype(jnp.bfloat16),
                w_ref[...].astype(jnp.bfloat16),
                preferred_element_type=jnp.float32)
    o_ref[...] = ((y + b_ref[...]) * m_ref[...]).astype(o_ref.dtype)


def _td_kernel_nomask(x_ref, w_ref, b_ref, o_ref):
    y = jnp.dot(x_ref[...].astype(jnp.bfloat16),
                w_ref[...].astype(jnp.bfloat16),
                preferred_element_type=jnp.float32)
    o_ref[...] = (y + b_ref[...]).astype(o_ref.dtype)


def time_distributed_dense(x, weight, bias, mask=None, *, max_tile_m=1024):
    """
    x:      (batch, time, a)   float32
    weight: (a, b)             float32  (already transposed vs torch Linear's (b, a))
    bias:   (b,)               float32
    mask:   (batch, time)      float32 or None
    returns (batch, time, b)   float32
    """
    batch, time, a = x.shape
    b = weight.shape[1]
    M = batch * time

    # ---- VMEM sizing: explicit, generation-aware ---------------------------
    try:
        phys_vmem = int(pltpu.get_tpu_info().vmem_capacity_bytes)
    except Exception:
        phys_vmem = 64 * 1024 * 1024          # conservative (v7x per-TC)
    vmem_limit = max(32 * 1024 * 1024, min(phys_vmem * 3 // 4, 96 * 1024 * 1024))
    tile_budget = int(vmem_limit * 0.8)       # headroom for compiler scratch

    # ---- N tile: full width unless b is a large multiple of 128 ------------
    if b % 128 != 0 or b <= 1024:
        TN = b                                # full-dim block (masked vst if b<128)
    elif b % 512 == 0:
        TN = 512
    elif b % 256 == 0:
        TN = 256
    else:
        TN = 128

    lanes_a = _round_up(a, 128)               # VMEM lane padding of the x tile
    lanes_n = _round_up(TN, 128)

    def vmem_bytes(tm):
        return (2 * tm * lanes_a * 4                        # x tile, f32, 2 bufs
                + 2 * _round_up(a, 8) * lanes_n * 4         # weight, f32, 2 bufs
                + 2 * 8 * lanes_n * 4                       # bias, 2 bufs
                + (2 * tm * 128 * 4 if mask is not None else 0)  # (TM,1) lane-padded
                + 2 * tm * lanes_n * 4)                     # out tile, f32, 2 bufs

    # ---- M tile: balanced (minimal padding), >= 2 grid steps when possible --
    if M <= 8:
        TM = M                                # single full-dim tile
    else:
        n_tiles = max(pl.cdiv(M, max_tile_m), 2)
        TM = _round_up(pl.cdiv(M, n_tiles), 8)
        while TM > 8 and vmem_bytes(TM) > tile_budget:
            TM = max(_round_up(TM // 2, 8), 8)

    Mp = _round_up(M, TM)
    grid = (Mp // TM, b // TN)

    # ---- Host prep: no pad/cast passes in the common case ------------------
    x2 = x.reshape(M, a).astype(jnp.float32)
    if Mp > M:
        x2 = jnp.pad(x2, ((0, Mp - M), (0, 0)))
    w2 = weight.astype(jnp.float32)
    b2 = bias.reshape(1, b).astype(jnp.float32)

    x_spec = pl.BlockSpec((TM, a), lambda i, j: (i, 0))
    w_spec = pl.BlockSpec((a, TN), lambda i, j: (0, j))
    bias_spec = pl.BlockSpec((1, TN), lambda i, j: (0, j))
    out_spec = pl.BlockSpec((TM, TN), lambda i, j: (i, j))
    out_shape = jax.ShapeDtypeStruct((Mp, b), jnp.float32)

    bytes_accessed = (M * a * 4 + a * b * 4 + b * 4 + M * b * 4
                      + (M * 4 if mask is not None else 0))
    cost = pl.CostEstimate(flops=2 * M * a * b, transcendentals=0,
                           bytes_accessed=int(bytes_accessed))
    cparams = pltpu.CompilerParams(
        dimension_semantics=("parallel", "parallel"),
        vmem_limit_bytes=int(vmem_limit))

    if mask is None:
        y2 = pl.pallas_call(
            _td_kernel_nomask,
            out_shape=out_shape,
            grid=grid,
            in_specs=[x_spec, w_spec, bias_spec],
            out_specs=out_spec,
            compiler_params=cparams,
            cost_estimate=cost,
        )(x2, w2, b2)
    else:
        m2 = mask.reshape(M, 1).astype(jnp.float32)
        if Mp > M:
            m2 = jnp.pad(m2, ((0, Mp - M), (0, 0)))
        mask_spec = pl.BlockSpec((TM, 1), lambda i, j: (i, 0))
        y2 = pl.pallas_call(
            _td_kernel_masked,
            out_shape=out_shape,
            grid=grid,
            in_specs=[x_spec, w_spec, bias_spec, mask_spec],
            out_specs=out_spec,
            compiler_params=cparams,
            cost_estimate=cost,
        )(x2, w2, b2, m2)

    if Mp > M:
        y2 = y2[:M]
    return y2.reshape(batch, time, b).astype(x.dtype)


if __name__ == "__main__":
    key = jax.random.PRNGKey(0)
    k_x, k_w, k_b, k_m = jax.random.split(key, 4)

    batch, time, a, b = 2, 8, 32, 64

    x = jax.random.normal(k_x, (batch, time, a), dtype=jnp.float32)
    # Deterministic synthetic parameters for the wrapped nn.Linear(a, b):
    weight = jax.random.normal(k_w, (a, b), dtype=jnp.float32) * 0.1
    bias = jax.random.normal(k_b, (b,), dtype=jnp.float32) * 0.1
    # Binary time mask (batch, time)
    mask = (jax.random.uniform(k_m, (batch, time)) > 0.3).astype(jnp.float32)

    y = time_distributed_dense(x, weight, bias, mask)
    jax.block_until_ready(y)
    assert y.shape == (batch, time, b)

    # Reference with the same bf16 input rounding (f32 accumulate) -> tight check.
    x_bf = x.astype(jnp.bfloat16).astype(jnp.float32)
    w_bf = weight.astype(jnp.bfloat16).astype(jnp.float32)
    y_ref_bf = ((x_bf.reshape(-1, a) @ w_bf + bias).reshape(batch, time, b)
                * mask[..., None])
    assert jnp.allclose(y, y_ref_bf, atol=2e-3, rtol=2e-3)

    # Loose check vs. the full-f32 torch-equivalent reference.
    y_ref_f32 = ((x.reshape(-1, a) @ weight + bias).reshape(batch, time, b)
                 * mask[..., None])
    assert jnp.allclose(y, y_ref_f32, atol=5e-2, rtol=5e-2)

    # mask=None path (specialized kernel, no mask buffer / multiply).
    y_nomask = time_distributed_dense(x, weight, bias, None)
    jax.block_until_ready(y_nomask)
    y_nomask_ref = (x_bf.reshape(-1, a) @ w_bf + bias).reshape(batch, time, b)
    assert jnp.allclose(y_nomask, y_nomask_ref, atol=2e-3, rtol=2e-3)

    # Larger case exercising a balanced multi-tile grid (M = 1200 -> 2x600 rows,
    # zero padding).
    bat2, t2 = 4, 300
    x2 = jax.random.normal(jax.random.PRNGKey(1), (bat2, t2, a), dtype=jnp.float32)
    m2 = (jax.random.uniform(jax.random.PRNGKey(2), (bat2, t2)) > 0.3).astype(jnp.float32)
    y2 = time_distributed_dense(x2, weight, bias, m2)
    jax.block_until_ready(y2)
    x2_bf = x2.astype(jnp.bfloat16).astype(jnp.float32)
    y2_ref = ((x2_bf.reshape(-1, a) @ w_bf + bias).reshape(bat2, t2, b)
              * m2[..., None])
    assert y2.shape == (bat2, t2, b)
    assert jnp.allclose(y2, y2_ref, atol=2e-3, rtol=2e-3)

    print("KERNEL_OK")
</pallas_src>

<mosaic_0001>
module attributes {stable_mosaic.version = 11 : i64} {
  func.func @_td_kernel_masked(%arg0: i32, %arg1: i32, %arg2: memref<8x32xf32, #tpu.memory_space<vmem>>, %arg3: memref<32x64xf32, #tpu.memory_space<vmem>>, %arg4: memref<1x64xf32, #tpu.memory_space<vmem>>, %arg5: memref<8x1xf32, #tpu.memory_space<vmem>>, %arg6: memref<8x64xf32, #tpu.memory_space<vmem>>) attributes {dimension_semantics = [#tpu.dimension_semantics<parallel>, #tpu.dimension_semantics<parallel>], iteration_bounds = array<i64: 2, 1>, scalar_prefetch = 0 : i64, scratch_operands = 0 : i64, tpu.core_type = #tpu.core_type<tc>, window_params = [{transform_indices = @transform_0, window_bounds = array<i64: 8, 32>}, {transform_indices = @transform_1, window_bounds = array<i64: 32, 64>}, {transform_indices = @transform_2, window_bounds = array<i64: 1, 64>}, {transform_indices = @transform_3, window_bounds = array<i64: 8, 1>}, {transform_indices = @transform_4, window_bounds = array<i64: 8, 64>}]} {
    %c0 = arith.constant 0 : index
    %c0_0 = arith.constant 0 : index
    %0 = vector.load %arg2[%c0, %c0_0] : memref<8x32xf32, #tpu.memory_space<vmem>>, vector<8x32xf32>
    %1 = arith.truncf %0 : vector<8x32xf32> to vector<8x32xbf16>
    %c0_1 = arith.constant 0 : index
    %c0_2 = arith.constant 0 : index
    %2 = vector.load %arg3[%c0_1, %c0_2] : memref<32x64xf32, #tpu.memory_space<vmem>>, vector<32x64xf32>
    %3 = arith.truncf %2 : vector<32x64xf32> to vector<32x64xbf16>
    %cst = arith.constant dense<0.000000e+00> : vector<8x64xf32>
    %4 = tpu.matmul %1, %3, %cst {dimension_numbers = #tpu.dot_dimension_numbers<[1], [0], [0], [1], [0, 0, 1, 1], [], []>} : vector<8x32xbf16>, vector<32x64xbf16>, vector<8x64xf32> -> vector<8x64xf32>
    %c0_3 = arith.constant 0 : index
    %c0_4 = arith.constant 0 : index
    %5 = vector.load %arg4[%c0_3, %c0_4] : memref<1x64xf32, #tpu.memory_space<vmem>>, vector<1x64xf32>
    %6 = vector.broadcast %5 : vector<1x64xf32> to vector<8x64xf32>
    %7 = arith.addf %4, %6 : vector<8x64xf32>
    %c0_5 = arith.constant 0 : index
    %c0_6 = arith.constant 0 : index
    %8 = vector.load %arg5[%c0_5, %c0_6] : memref<8x1xf32, #tpu.memory_space<vmem>>, vector<8x1xf32>
    %9 = vector.broadcast %8 : vector<8x1xf32> to vector<8x64xf32>
    %10 = arith.mulf %7, %9 : vector<8x64xf32>
    %c0_7 = arith.constant 0 : index
    %c0_8 = arith.constant 0 : index
    %11 = vector.load %arg6[%c0_7, %c0_8] : memref<8x64xf32, #tpu.memory_space<vmem>>, vector<8x64xf32>
    tpu.vector_store %arg6[%c0_7, %c0_8], %10 {strides = array<i32>} : memref<8x64xf32, #tpu.memory_space<vmem>>, vector<8x64xf32>,
    return
  }
  func.func @transform_0(%arg0: i32, %arg1: i32) -> (i32, i32) {
    %c0_i32 = arith.constant 0 : i32
    %c0_i32_0 = arith.constant 0 : i32
    return %arg0, %c0_i32 : i32, i32
  }
  func.func @transform_1(%arg0: i32, %arg1: i32) -> (i32, i32) {
    %c0_i32 = arith.constant 0 : i32
    %c0_i32_0 = arith.constant 0 : i32
    return %c0_i32, %arg1 : i32, i32
  }
  func.func @transform_2(%arg0: i32, %arg1: i32) -> (i32, i32) {
    %c0_i32 = arith.constant 0 : i32
    %c0_i32_0 = arith.constant 0 : i32
    return %c0_i32, %arg1 : i32, i32
  }
  func.func @transform_3(%arg0: i32, %arg1: i32) -> (i32, i32) {
    %c0_i32 = arith.constant 0 : i32
    %c0_i32_0 = arith.constant 0 : i32
    return %arg0, %c0_i32 : i32, i32
  }
  func.func @transform_4(%arg0: i32, %arg1: i32) -> (i32, i32) {
    %c0_i32 = arith.constant 0 : i32
    return %arg0, %arg1 : i32, i32
  }
}

</mosaic_0001>

<llo_original>
// kernel: tpu_custom_call.1
$region0: #{tpu_custom_call.1}
  #allocation0 [shape = 'u32[]', space=smem, size = 0x4, offset = 0x4, fixed_abs, tag = 'smem constant byte address 0x4 - core index']
  #allocation1 [shape = 'u32[144,128]{1,0:T(1,128)}', space=vmem, size = 0x12000, scoped, tag = 'internal scratch']
  %s0 = inlined_call_operand.vmem [shape: f32[16,32], index: 0, kind: input, shape index: {}]
  %s1 = inlined_call_operand.hbm [shape: f32[32,64], index: 1, kind: input, shape index: {}]
  %s2 = inlined_call_operand.vmem [shape: f32[1,64], index: 2, kind: input, shape index: {}]
  %s3 = inlined_call_operand.vmem [shape: f32[16,1], index: 3, kind: input, shape index: {}]
  %s4 = inlined_call_operand.hbm [shape: f32[16,64], index: 4, kind: output, shape index: {}]
  %s5 = sld [smem:[#allocation0]]
  $region53: #{tpu_custom_call.1} parent=0
    _
  %s7 = ssub.s32 1, %s5
  %s8 = scalar_select 0, %s7, %s5
  $region1: #{tpu_custom_call.1} parent=0
    #allocation2 [shape = 'u8[16384]{0}', space=vmem, size = 0x4000, scoped, tag = 'input window, operand 1, single buffered']
    #allocation3 [shape = 's32[2]{0}', space=sflag, size = 0x8, scoped, tag = 'scoped memory for tpu_custom_call.1']
    #allocation4 [shape = 's32[2]{0}', space=sflag, size = 0x8, scoped, tag = 'scoped memory for tpu_custom_call.1']
    #allocation5 [shape = 'u8[8192]{0}', space=vmem, size = 0x2000, scoped, tag = 'output window, operand 0']
    %9 = vsyncpa [#allocation3], 0
    %10 = vsyncpa [#allocation4], 0
    %s11 = scalar_lea.sflag [#allocation4], 1
    %12 = vsyncpa %s11, 0
    loop: start=0, step=1, limit=4
    $region2: #{tpu_custom_call.1} parent=1 // loop_pre_header
      _
    $region3: #{tpu_custom_call.1} parent=1 // loop_header
      %s14 = sphi 0, %s18
      %p15 = scmp.ge.s32.totalorder %s14, 4
      %s21 = sphi 0, %s33
      %s22 = sphi 0, %s29
      %s23 = sphi 0, %s21
      %s24 = sphi 0, %s22
      %s25 = sphi 0, %s23
      %s26 = sphi 0, %s24
      %s36 = sphi 0, %s38
      %s39 = sphi 0, %s36
      %s40 = sphi 0, %s39
      %s56 = sphi 0, %s40
      %s62 = sphi 0, %s64
      %s65 = sphi 0, %s62
      %s66 = sphi 0, %s65
      %s82 = sphi 0, %s66
      %s88 = sphi 0, %s90
      %s91 = sphi 0, %s88
      %s92 = sphi 0, %s91
      %s108 = sphi 0, %s92
      %s114 = sphi 0, %s116
      %s117 = sphi 0, %s114
      %s118 = sphi 0, %s117
      %s134 = sphi 0, %s118
      %s142 = sphi 0, %s144
      %s145 = sphi 0, %s142
      %s146 = sphi 0, %s145
      %s162 = sphi 0, %s146
    $region4: #{tpu_custom_call.1} parent=1 // loop_header_branch
      %17 = sbr.rel (%p15) target = $region8
    $region5: #{tpu_custom_call.1} parent=1 // loop_body
      %s19 = ssub.s32 %s14, 1
      %s20 = ssub.s32 %s14, 2
      %s27 = sadd.s32 1, %s22
      %p28 = scmp.ge.s32.totalorder %s27, 1
      %s29 = scalar_select %p28, 0, %s27
      %s30 = sadd.s32 1, %s21
      %s31 = scalar_select %p28, %s30, %s21
      %p32 = scmp.ge.s32.totalorder %s31, 2
      %s33 = scalar_select %p32, 0, %s31
      %s34 = ssub.s32 %s21, %s33
      %p35 = scmp.eq.s32.totalorder %s34, 0
      %s37 = sadd.s32 %s36, 1
      %s38 = scalar_select %p35, %s36, %s37
      %p41 = pneg %p35
      %p42 = scmp.eq.s32.totalorder %s14, 1
      %p43 = por %p41, %p42
      %p44 = scmp.ne.s32.totalorder %s36, %s39
      %p45 = scmp.eq.s32.totalorder %s14, 0
      %p46 = por %p44, %p45
      %p47 = scmp.ne.s32.totalorder %s36, %s39
      %p48 = scmp.eq.s32.totalorder %s19, 1
      %p49 = por %p47, %p48
      %p50 = scmp.ne.s32.totalorder %s39, %s40
      %p51 = scmp.eq.s32.totalorder %s19, 0
      %p52 = por %p50, %p51
      %p53 = scmp.ne.s32.totalorder %s39, %s40
      %p54 = scmp.eq.s32.totalorder %s20, 1
      %p55 = por %p53, %p54
      %p57 = scmp.ne.s32.totalorder %s40, %s56
      %p58 = scmp.eq.s32.totalorder %s20, 0
      %p59 = por %p57, %p58
      %s60 = ssub.s32 %s22, %s29
      %p61 = scmp.eq.s32.totalorder %s60, 0
      %s63 = sadd.s32 %s62, 1
      %s64 = scalar_select %p61, %s62, %s63
      %p67 = pneg %p61
      %p68 = scmp.eq.s32.totalorder %s14, 1
      %p69 = por %p67, %p68
      %p70 = scmp.ne.s32.totalorder %s62, %s65
      %p71 = scmp.eq.s32.totalorder %s14, 0
      %p72 = por %p70, %p71
      %p73 = scmp.ne.s32.totalorder %s62, %s65
      %p74 = scmp.eq.s32.totalorder %s19, 1
      %p75 = por %p73, %p74
      %p76 = scmp.ne.s32.totalorder %s65, %s66
      %p77 = scmp.eq.s32.totalorder %s19, 0
      %p78 = por %p76, %p77
      %p79 = scmp.ne.s32.totalorder %s65, %s66
      %p80 = scmp.eq.s32.totalorder %s20, 1
      %p81 = por %p79, %p80
      %p83 = scmp.ne.s32.totalorder %s66, %s82
      %p84 = scmp.eq.s32.totalorder %s20, 0
      %p85 = por %p83, %p84
      %s86 = ssub.s32 %s22, %s29
      %p87 = scmp.eq.s32.totalorder %s86, 0
      %s89 = sadd.s32 %s88, 1
      %s90 = scalar_select %p87, %s88, %s89
      %p93 = pneg %p87
      %p94 = scmp.eq.s32.totalorder %s14, 1
      %p95 = por %p93, %p94
      %p96 = scmp.ne.s32.totalorder %s88, %s91
      %p97 = scmp.eq.s32.totalorder %s14, 0
      %p98 = por %p96, %p97
      %p99 = scmp.ne.s32.totalorder %s88, %s91
      %p100 = scmp.eq.s32.totalorder %s19, 1
      %p101 = por %p99, %p100
      %p102 = scmp.ne.s32.totalorder %s91, %s92
      %p103 = scmp.eq.s32.totalorder %s19, 0
      %p104 = por %p102, %p103
      %p105 = scmp.ne.s32.totalorder %s91, %s92
      %p106 = scmp.eq.s32.totalorder %s20, 1
      %p107 = por %p105, %p106
      %p109 = scmp.ne.s32.totalorder %s92, %s108
      %p110 = scmp.eq.s32.totalorder %s20, 0
      %p111 = por %p109, %p110
      %s112 = ssub.s32 %s21, %s33
      %p113 = scmp.eq.s32.totalorder %s112, 0
      %s115 = sadd.s32 %s114, 1
      %s116 = scalar_select %p113, %s114, %s115
      %p119 = pneg %p113
      %p120 = scmp.eq.s32.totalorder %s14, 1
      %p121 = por %p119, %p120
      %p122 = scmp.ne.s32.totalorder %s114, %s117
      %p123 = scmp.eq.s32.totalorder %s14, 0
      %p124 = por %p122, %p123
      %p125 = scmp.ne.s32.totalorder %s114, %s117
      %p126 = scmp.eq.s32.totalorder %s19, 1
      %p127 = por %p125, %p126
      %p128 = scmp.ne.s32.totalorder %s117, %s118
      %p129 = scmp.eq.s32.totalorder %s19, 0
      %p130 = por %p128, %p129
      %p131 = scmp.ne.s32.totalorder %s117, %s118
      %p132 = scmp.eq.s32.totalorder %s20, 1
      %p133 = por %p131, %p132
      %p135 = scmp.ne.s32.totalorder %s118, %s134
      %p136 = scmp.eq.s32.totalorder %s20, 0
      %p137 = por %p135, %p136
      %s138 = ssub.s32 %s21, %s33
      %s139 = ssub.s32 %s22, %s29
      %s140 = sor.u32 %s138, %s139
      %p141 = scmp.eq.s32.totalorder %s140, 0
      %s143 = sadd.s32 %s142, 1
      %s144 = scalar_select %p141, %s142, %s143
      %p147 = pneg %p141
      %p148 = scmp.eq.s32.totalorder %s14, 1
      %p149 = por %p147, %p148
      %p150 = scmp.ne.s32.totalorder %s142, %s145
      %p151 = scmp.eq.s32.totalorder %s14, 0
      %p152 = por %p150, %p151
      %p153 = scmp.ne.s32.totalorder %s142, %s145
      %p154 = scmp.eq.s32.totalorder %s19, 1
      %p155 = por %p153, %p154
      %p156 = scmp.ne.s32.totalorder %s145, %s146
      %p157 = scmp.eq.s32.totalorder %s19, 0
      %p158 = por %p156, %p157
      %p159 = scmp.ne.s32.totalorder %s145, %s146
      %p160 = scmp.eq.s32.totalorder %s20, 1
      %p161 = por %p159, %p160
      %p163 = scmp.ne.s32.totalorder %s146, %s162
      %p164 = scmp.eq.s32.totalorder %s20, 0
      %p165 = por %p163, %p164
      %p166 = scmp.le.s32.totalorder 1, %s14
      %p167 = scmp.lt.s32.totalorder %s14, 3
      %p168 = pnand %p166, %p167
      %p169 = pneg %p168
      // Predicated region
      $region9: #{tpu_custom_call.1} parent=5 // pred_check
        _
      $region10: #{tpu_custom_call.1} parent=5 // pred_check_branch
        %171 = sbr.rel (%p168) target = $region12
      $region11: #{tpu_custom_call.1} parent=5 // pred_region
        %s172 = ssub.s32 %s14, 1
        // Predicated region
        $region13: #{tpu_custom_call.1} parent=11 // pred_check
          %p173 = pneg %p78
        $region14: #{tpu_custom_call.1} parent=11 // pred_check_branch
          %175 = sbr.rel (%p173) target = $region16
        $region15: #{tpu_custom_call.1} parent=11 // pred_region
          %s177 = ssub.s32 512, 512
          %178 = vsyncadd [#allocation3], %s177
          %s179 = smul.addr %s24, 128
          %s180 = scalar_lea.hbm %s1, %s179
          %s181 = sshll.u32 [#allocation2], 4
          %s182 = int_to_ptr.vmem [resolvable:$true] %s181
          %187 = dma.hbm_to_vmem [thread:$0]  %s180, 512, %s182, [#allocation3], 128, 128, 8
        $region16: #{tpu_custom_call.1} parent=11 // pred_fallthru
          _
        // Predicated region
        $region17: #{tpu_custom_call.1} parent=11 // pred_check
          %p188 = pneg %p104
        $region18: #{tpu_custom_call.1} parent=11 // pred_check_branch
          %190 = sbr.rel (%p188) target = $region20
        $region19: #{tpu_custom_call.1} parent=11 // pred_region
          %p191 = scmp.lt.s32.totalorder %s24, 0
          %s192 = scalar_select %p191, %s24, 0
          %s193 = scalar_lea.vmem %s2, %s192
        $region20: #{tpu_custom_call.1} parent=11 // pred_fallthru
          _
      $region12: #{tpu_custom_call.1} parent=5 // pred_fallthru
        _
      %p194 = scmp.lt.s32.totalorder %s14, 2
      // Predicated region
      $region21: #{tpu_custom_call.1} parent=5 // pred_check
        %p195 = pneg %p194
      $region22: #{tpu_custom_call.1} parent=5 // pred_check_branch
        %197 = sbr.rel (%p195) target = $region24
      $region23: #{tpu_custom_call.1} parent=5 // pred_region
        // Predicated region
        $region25: #{tpu_custom_call.1} parent=23 // pred_check
          %p198 = pneg %p46
        $region26: #{tpu_custom_call.1} parent=23 // pred_check_branch
          %200 = sbr.rel (%p198) target = $region28
        $region27: #{tpu_custom_call.1} parent=23 // pred_region
          %p201 = scmp.lt.s32.totalorder %s21, 1
          %s202 = scalar_select %p201, %s21, 1
          %s203 = smul.addr %s202, 8
          %s204 = scalar_lea.vmem %s0, %s203
        $region28: #{tpu_custom_call.1} parent=23 // pred_fallthru
          _
        // Predicated region
        $region29: #{tpu_custom_call.1} parent=23 // pred_check
          %p205 = pneg %p124
        $region30: #{tpu_custom_call.1} parent=23 // pred_check_branch
          %207 = sbr.rel (%p205) target = $region32
        $region31: #{tpu_custom_call.1} parent=23 // pred_region
          %p208 = scmp.lt.s32.totalorder %s21, 1
          %s209 = scalar_select %p208, %s21, 1
          %s210 = smul.addr %s209, 8
          %s211 = scalar_lea.vmem %s3, %s210
        $region32: #{tpu_custom_call.1} parent=23 // pred_fallthru
          _
      $region24: #{tpu_custom_call.1} parent=5 // pred_fallthru
        _
      %p212 = scmp.le.s32.totalorder 1, %s14
      %p213 = scmp.lt.s32.totalorder %s14, 3
      %p214 = pnand %p212, %p213
      %p215 = pneg %p214
      // Predicated region
      $region33: #{tpu_custom_call.1} parent=5 // pred_check
        _
      $region34: #{tpu_custom_call.1} parent=5 // pred_check_branch
        %217 = sbr.rel (%p214) target = $region36
      $region35: #{tpu_custom_call.1} parent=5 // pred_region
        %s218 = ssub.s32 %s14, 1
        // Predicated region
        $region37: #{tpu_custom_call.1} parent=35 // pred_check
          %p219 = pneg %p78
        $region38: #{tpu_custom_call.1} parent=35 // pred_check_branch
          %221 = sbr.rel (%p219) target = $region40
        $region39: #{tpu_custom_call.1} parent=35 // pred_region
          %222 = dma.done [#allocation3], 512
        $region40: #{tpu_custom_call.1} parent=35 // pred_fallthru
          _
        %p223 = scmp.lt.s32.totalorder %s23, 1
        %s224 = scalar_select %p223, %s23, 1
        %s225 = smul.addr %s224, 8
        %s226 = scalar_lea.vmem %s0, %s225
        %p227 = pneg %p52
        %p228 = pneg %p49
        %p229 = pneg %p78
        %p230 = pneg %p75
        %p231 = scmp.lt.s32.totalorder %s24, 0
        %s232 = scalar_select %p231, %s24, 0
        %s233 = scalar_lea.vmem %s2, %s232
        %p234 = pneg %p104
        %p235 = pneg %p101
        %p236 = scmp.lt.s32.totalorder %s23, 1
        %s237 = scalar_select %p236, %s23, 1
        %s238 = smul.addr %s237, 8
        %s239 = scalar_lea.vmem %s3, %s238
        %p240 = pneg %p130
        %p241 = pneg %p127
        %p242 = pneg %p158
        %p243 = pneg %p155
        %s244 = sand.u32 %s145, 1
        %s245 = scalar_lea.sflag [#allocation4], %s244
        %s246 = sand.u32 %s145, 1
        %s247 = smul.addr %s246, 8
        %s248 = scalar_lea.vmem [#allocation5], %s247
        %p249 = scmp.lt.s32.totalorder %s23, 1
        %s250 = scalar_select %p249, %s23, 1
        %s251 = smul.addr %s250, 8
        %s252 = scalar_lea.vmem %s0, %s251
        %p253 = scmp.lt.s32.totalorder %s24, 0
        %s254 = scalar_select %p253, %s24, 0
        %s255 = scalar_lea.vmem %s2, %s254
        %p256 = scmp.lt.s32.totalorder %s23, 1
        %s257 = scalar_select %p256, %s23, 1
        %s258 = smul.addr %s257, 8
        %s259 = scalar_lea.vmem %s3, %s258
        %v261 = vld [vmem:[%s252] sm:$0xff]
        %v262 = vpack.c.bf16 %v261, %v261
        %v263 = vld [vmem:[#allocation2] sm:$0xff]
        %v264 = vld [vmem:[#allocation2 + $0x8] sm:$0xff]
        %v265 = vld [vmem:[#allocation2 + $0x10] sm:$0xff]
        %v266 = vld [vmem:[#allocation2 + $0x18] sm:$0xff]
        %v267 = vpack.c.bf16 %v264, %v263
        %v268 = vpack.c.bf16 %v266, %v265
        %v269 = vld [vmem:[%s255] sm:$0x1]
        %v271 = vlaneseq
        %v272 = vshrl.u32 %v271, 7
        %v273 = vsub.s32 0, %v272
        %v274 = vrot.slane %v269, %v273
        %vm276 = vcmask 261120
        %v278 = vsel %vm276, %v262, 0
        %280 = vmatprep.subr.bf16.mxu0 0
        %281 = vmatpush1.bf16.msra.mxu0 %v267
        %282 = vmatprep.subr.bf16.mxu0 0
        %283 = vmatpush1.bf16.msra.mxu0 %v268
        %284 = vmatprep.subr.bf16.mxu0 0
        %285 = vmatpush1.bf16.msra.mxu0 0
        %286 = vmatprep.subr.bf16.mxu0 0
        %287 = vmatpush1.bf16.msra.mxu0 0
        %288 = vmatprep.subr.bf16.mxu0 0
        %289 = vmatpush1.bf16.msra.mxu0 0
        %290 = vmatprep.subr.bf16.mxu0 0
        %291 = vmatpush1.bf16.msra.mxu0 0
        %292 = vmatprep.subr.bf16.mxu0 0
        %293 = vmatpush1.bf16.msra.mxu0 0
        %294 = vmatprep.subr.bf16.mxu0 0
        %295 = vmatpush1.bf16.msra.mxu0 0
        %296 = vmatprep.subr.bf16.mxu0 0
        %297 = vmatpush1.bf16.msra.mxu0 0
        %298 = vmatprep.subr.bf16.mxu0 0
        %299 = vmatpush1.bf16.msra.mxu0 0
        %300 = vmatprep.subr.bf16.mxu0 0
        %301 = vmatpush1.bf16.msra.mxu0 0
        %302 = vmatprep.subr.bf16.mxu0 0
        %303 = vmatpush1.bf16.msra.mxu0 0
        %304 = vmatprep.subr.bf16.mxu0 0
        %305 = vmatpush1.bf16.msra.mxu0 0
        %306 = vmatprep.subr.bf16.mxu0 0
        %307 = vmatpush1.bf16.msra.mxu0 0
        %308 = vmatprep.subr.bf16.mxu0 0
        %309 = vmatpush1.bf16.msra.mxu0 0
        %310 = vmatprep.subr.bf16.mxu0 0
        %311 = vmatpush1.bf16.msra.mxu0 0
        %312 = vmatprep.mubr.bf16.mxu0 0
        %313 = vmatmul.mubr.bf16.gmra.mrb[0].mxu0 %v278
        %v314 = vpop.f32.mrb[0].mxu0
        %v315 = vadd.f32 %v274, %v314
        %v316 = vpop.f32.mrb[0].mxu0
        %v317 = vpop.f32.mrb[0].mxu0
        %v318 = vpop.f32.mrb[0].mxu0
        %319 = vdwg.mxu0
        %v320 = vld [vmem:[%s259] sm:$0xff]
        %322 = vset.pattern.permute.xlu0 0
        %323 = vperm.xlu0 %322, %v320
        %v324 = vpop.permute.xlu0 %323
        %v326 = vmul.f32 %v315, %v324
        %vm327 = vcmask 523264
        %328 = vst.msk [vmem:[%s248] sm:$0xff] %vm327, %v326
        %s329 = sand.u32 %s145, 1
        %s330 = scalar_lea.sflag [#allocation4], %s329
        %s331 = sand.u32 %s145, 1
        %s332 = smul.addr %s331, 8
        %s333 = scalar_lea.vmem [#allocation5], %s332
        // Predicated region
        $region41: #{tpu_custom_call.1} parent=35 // pred_check
          %p334 = pneg %p155
        $region42: #{tpu_custom_call.1} parent=35 // pred_check_branch
          %336 = sbr.rel (%p334) target = $region44
        $region43: #{tpu_custom_call.1} parent=35 // pred_region
          %s338 = ssub.s32 128, 128
          %339 = vsyncadd %s330, %s338
          %s340 = sadd.s32 %s24, %s23
          %s341 = smul.addr %s340, 128
          %s342 = scalar_lea.hbm %s4, %s341
          %s344 = sshll.u32 %s333, 4
          %s345 = int_to_ptr.vmem [resolvable:$true] %s344
          %347 = dma.vmem_to_hbm [thread:$0]  %s345, 128, %s342, %s330
        $region44: #{tpu_custom_call.1} parent=35 // pred_fallthru
          _
      $region36: #{tpu_custom_call.1} parent=5 // pred_fallthru
        _
      %p348 = scmp.le.s32.totalorder 2, %s14
      // Predicated region
      $region45: #{tpu_custom_call.1} parent=5 // pred_check
        %p349 = pneg %p348
      $region46: #{tpu_custom_call.1} parent=5 // pred_check_branch
        %351 = sbr.rel (%p349) target = $region48
      $region47: #{tpu_custom_call.1} parent=5 // pred_region
        %s352 = ssub.s32 %s14, 2
        // Predicated region
        $region49: #{tpu_custom_call.1} parent=47 // pred_check
          %p353 = pneg %p161
        $region50: #{tpu_custom_call.1} parent=47 // pred_check_branch
          %355 = sbr.rel (%p353) target = $region52
        $region51: #{tpu_custom_call.1} parent=47 // pred_region
          %s356 = sand.u32 %s146, 1
          %s357 = scalar_lea.sflag [#allocation4], %s356
          %s358 = sand.u32 %s146, 1
          %s359 = smul.addr %s358, 8
          %s360 = scalar_lea.vmem [#allocation5], %s359
          %361 = dma.done %s357, 128
        $region52: #{tpu_custom_call.1} parent=47 // pred_fallthru
          _
      $region48: #{tpu_custom_call.1} parent=5 // pred_fallthru
        _
    $region6: #{tpu_custom_call.1} parent=1 // loop_footer
      %s18 = sadd.s32 1, %s14
    $region7: #{tpu_custom_call.1} parent=1 // loop_footer_branch
      %13 = sbr.rel target = $region3
    $region8: #{tpu_custom_call.1} parent=1 // loop_exit
      _
    %362 = vsyncpa [#allocation3], 1
    %s363 = scalar_lea.sflag [#allocation3], 1
    %364 = vsyncpa %s363, 1
    %365 = vsyncpa [#allocation4], 1
    %s366 = scalar_lea.sflag [#allocation4], 1
    %367 = vsyncpa %s366, 1

</llo_original>
